<compile_context>
chip_gen: v7x
topology: tpu7x:2x2x1
jax: 0.10.0
libtpu: 0.0.40
codegen_flags: <defaults>
</compile_context>

<pallas_src>
import jax
import jax.numpy as jnp
from jax import lax
from jax.experimental import pallas as pl
from jax.experimental.pallas import tpu as pltpu


def _round_up(x, m):
    return ((x + m - 1) // m) * m


def _round_down(x, m):
    return (x // m) * m


def _cont_emb_kernel(x_ref, w_ref, b_ref, o_ref):
    # x_ref: (tn, in_size)         token tile of the input
    # w_ref: (in_size, feat)       block-diagonal weights (resident, f32)
    # b_ref: (1, feat)             bias pre-broadcast over out_size (resident, f32)
    # o_ref: (tn, feat)            lane-dense output slab, feat = in_size*out_size
    #
    # out[n, i*out_size + o] = x[n, i] * W[i, o] + bias[i]
    x = x_ref[...].astype(jnp.float32)
    acc = jnp.dot(
        x,
        w_ref[...],
        preferred_element_type=jnp.float32,
        precision=lax.Precision.HIGHEST,
    )
    o_ref[...] = (acc + b_ref[...]).astype(o_ref.dtype)


def continuous_embedding(
    x, weights, bias, *, token_tile=8192, vmem_limit_bytes=32 * 1024 * 1024
):
    """x: (B, S, in_size); weights: (1, in_size, out_size); bias: (1, in_size, 1).

    Returns (B, S, in_size, out_size), matching ContinuousEmbedding.forward.
    """
    B, S, in_size = x.shape
    out_size = weights.shape[-1]
    feat = in_size * out_size
    N = B * S
    itemsize = jnp.dtype(x.dtype).itemsize

    # Block-diagonal weight: w_bd[k, i*out_size + o] = W[i, o] if k == i else 0,
    # so x @ w_bd computes x[:, i] * W[i, o] in one MXU pass. Bias is
    # pre-broadcast over out_size. Both are f32 (compute dtype), built once.
    eye = jnp.eye(in_size, dtype=jnp.float32)
    w_bd = (
        eye[:, :, None] * weights[0].astype(jnp.float32)[None, :, :]
    ).reshape(in_size, feat)
    b_flat = jnp.broadcast_to(
        bias.reshape(in_size, 1).astype(jnp.float32), (in_size, out_size)
    ).reshape(1, feat)

    # Sublane multiple for this dtype's native VMEM tile (f32:8, bf16:16, i8:32).
    mult = max(8, 32 // itemsize)

    # VMEM budget for the double-buffered x + output blocks. The (tn, in_size)
    # x block pads its last dim to a full 128-lane tile in VMEM, so charge
    # that, not just in_size elements.
    x_row_bytes = _round_up(in_size, 128) * itemsize
    o_row_bytes = feat * itemsize
    per_token_bytes = 2 * (x_row_bytes + o_row_bytes)  # double-buffered
    budget_bytes = 20 * 1024 * 1024                    # headroom under the 32 MiB limit
    tn_budget = max(mult, _round_down(budget_bytes // per_token_bytes, mult))

    tn = min(_round_up(token_tile, mult), tn_budget, _round_up(N, mult))
    grid = (pl.cdiv(N, tn),)  # ragged last block handled by Pallas (no pad/slice)

    cost = pl.CostEstimate(
        flops=2 * N * in_size * feat,
        transcendentals=0,
        bytes_accessed=(N * in_size + N * feat) * itemsize
        + (in_size * feat + feat) * 4,
    )

    # NOTE: if feat is not a multiple of 128 the output stores are partially
    # masked; correctness is unaffected and the default shapes (4*32=128) are
    # already lane-aligned.
    out_flat = pl.pallas_call(
        _cont_emb_kernel,
        out_shape=jax.ShapeDtypeStruct((N, feat), x.dtype),
        grid_spec=pltpu.PrefetchScalarGridSpec(
            num_scalar_prefetch=0,
            grid=grid,
            in_specs=[
                pl.BlockSpec((tn, in_size), lambda n: (n, 0)),
                pl.BlockSpec((in_size, feat), lambda n: (0, 0)),  # resident weights
                pl.BlockSpec((1, feat), lambda n: (0, 0)),        # resident bias
            ],
            out_specs=pl.BlockSpec((tn, feat), lambda n: (n, 0)),
        ),
        compiler_params=pltpu.CompilerParams(
            dimension_semantics=("parallel",),
            vmem_limit_bytes=vmem_limit_bytes,
        ),
        cost_estimate=cost,
    )(x.reshape(N, in_size), w_bd, b_flat)

    return out_flat.reshape(B, S, in_size, out_size)


def continuous_embedding_ref(x, weights, bias):
    B, S, in_size = x.shape
    out_size = weights.shape[-1]
    xf = x.astype(jnp.float32).reshape(-1, in_size)[:, :, None]  # (N, in, 1)
    out = xf * weights.astype(jnp.float32) + bias.astype(jnp.float32)
    return out.reshape(B, S, in_size, out_size).astype(x.dtype)


if __name__ == "__main__":
    init_std = 0.1
    key = jax.random.PRNGKey(0)

    # Case 1: shapes consistent with the module (batch=2, seq=8, in=4, out=32).
    B, S, in_size, out_size = 2, 8, 4, 32
    kx, kw, kb = jax.random.split(key, 3)
    x = jax.random.normal(kx, (B, S, in_size), dtype=jnp.float32)
    weights = init_std * jax.random.normal(
        kw, (1, in_size, out_size), dtype=jnp.float32
    )
    bias = jax.random.uniform(kb, (1, in_size, 1), dtype=jnp.float32)

    out = jax.block_until_ready(continuous_embedding(x, weights, bias))
    ref = continuous_embedding_ref(x, weights, bias)
    assert out.shape == (B, S, in_size, out_size)
    assert jnp.allclose(out, ref, atol=1e-5, rtol=1e-5)

    # Case 2: token count not divisible by the tile (exercises the ragged
    # last block handled directly by Pallas — no pad / output slice).
    B2, S2 = 3, 7
    kx2 = jax.random.fold_in(kx, 1)
    x2 = jax.random.normal(kx2, (B2, S2, in_size), dtype=jnp.float32)
    out2 = jax.block_until_ready(continuous_embedding(x2, weights, bias))
    ref2 = continuous_embedding_ref(x2, weights, bias)
    assert out2.shape == (B2, S2, in_size, out_size)
    assert jnp.allclose(out2, ref2, atol=1e-5, rtol=1e-5)

    print("KERNEL_OK")
</pallas_src>

<mosaic_0001>
module attributes {stable_mosaic.version = 11 : i64} {
  func.func @_cont_emb_kernel(%arg0: i32, %arg1: memref<16x4xf32, #tpu.memory_space<vmem>>, %arg2: memref<4x128xf32, #tpu.memory_space<vmem>>, %arg3: memref<1x128xf32, #tpu.memory_space<vmem>>, %arg4: memref<16x128xf32, #tpu.memory_space<vmem>>) attributes {dimension_semantics = [#tpu.dimension_semantics<parallel>], iteration_bounds = array<i64: 1>, scalar_prefetch = 0 : i64, scratch_operands = 0 : i64, tpu.core_type = #tpu.core_type<tc>, window_params = [{transform_indices = @transform_0, window_bounds = array<i64: 16, 4>}, {pipeline_mode = #tpu.pipeline_mode<synchronous>, transform_indices = @transform_1, window_bounds = array<i64: 4, 128>}, {pipeline_mode = #tpu.pipeline_mode<synchronous>, transform_indices = @transform_2, window_bounds = array<i64: 1, 128>}, {transform_indices = @transform_3, window_bounds = array<i64: 16, 128>}]} {
    %c0 = arith.constant 0 : index
    %c0_0 = arith.constant 0 : index
    %0 = vector.load %arg1[%c0, %c0_0] : memref<16x4xf32, #tpu.memory_space<vmem>>, vector<16x4xf32>
    %c0_1 = arith.constant 0 : index
    %c0_2 = arith.constant 0 : index
    %1 = vector.load %arg2[%c0_1, %c0_2] : memref<4x128xf32, #tpu.memory_space<vmem>>, vector<4x128xf32>
    %cst = arith.constant dense<0.000000e+00> : vector<16x128xf32>
    %2 = tpu.matmul %0, %1, %cst {dimension_numbers = #tpu.dot_dimension_numbers<[1], [0], [0], [1], [0, 0, 1, 1], [], []>, precision = #tpu.contract_precision<fp32>} : vector<16x4xf32>, vector<4x128xf32>, vector<16x128xf32> -> vector<16x128xf32>
    %c0_3 = arith.constant 0 : index
    %c0_4 = arith.constant 0 : index
    %3 = vector.load %arg3[%c0_3, %c0_4] : memref<1x128xf32, #tpu.memory_space<vmem>>, vector<1x128xf32>
    %4 = vector.broadcast %3 : vector<1x128xf32> to vector<16x128xf32>
    %5 = arith.addf %2, %4 : vector<16x128xf32>
    %c0_5 = arith.constant 0 : index
    %c0_6 = arith.constant 0 : index
    %6 = vector.load %arg4[%c0_5, %c0_6] : memref<16x128xf32, #tpu.memory_space<vmem>>, vector<16x128xf32>
    tpu.vector_store %arg4[%c0_5, %c0_6], %5 {strides = array<i32>} : memref<16x128xf32, #tpu.memory_space<vmem>>, vector<16x128xf32>,
    return
  }
  func.func @transform_0(%arg0: i32) -> (i32, i32) {
    %c0_i32 = arith.constant 0 : i32
    %c0_i32_0 = arith.constant 0 : i32
    return %arg0, %c0_i32 : i32, i32
  }
  func.func @transform_1(%arg0: i32) -> (i32, i32) {
    %c0_i32 = arith.constant 0 : i32
    %c0_i32_0 = arith.constant 0 : i32
    %c0_i32_1 = arith.constant 0 : i32
    return %c0_i32, %c0_i32_0 : i32, i32
  }
  func.func @transform_2(%arg0: i32) -> (i32, i32) {
    %c0_i32 = arith.constant 0 : i32
    %c0_i32_0 = arith.constant 0 : i32
    %c0_i32_1 = arith.constant 0 : i32
    return %c0_i32, %c0_i32_0 : i32, i32
  }
  func.func @transform_3(%arg0: i32) -> (i32, i32) {
    %c0_i32 = arith.constant 0 : i32
    %c0_i32_0 = arith.constant 0 : i32
    return %arg0, %c0_i32 : i32, i32
  }
}

</mosaic_0001>

<llo_original>
// kernel: tpu_custom_call.1
$region0: #{tpu_custom_call.1}
  #allocation0 [shape = 'u32[]', space=smem, size = 0x4, offset = 0x4, fixed_abs, tag = 'smem constant byte address 0x4 - core index']
  #allocation1 [shape = 'u32[144,128]{1,0:T(1,128)}', space=vmem, size = 0x12000, scoped, tag = 'internal scratch']
  %s0 = inlined_call_operand.vmem [shape: f32[16,4], index: 0, kind: input, shape index: {}]
  %s1 = inlined_call_operand.vmem [shape: f32[4,128], index: 1, kind: input, shape index: {}]
  %s2 = inlined_call_operand.vmem [shape: f32[1,128], index: 2, kind: input, shape index: {}]
  %s3 = inlined_call_operand.hbm [shape: f32[16,128], index: 3, kind: output, shape index: {}]
  %s4 = sld [smem:[#allocation0]]
  $region22: #{tpu_custom_call.1} parent=0
    _
  %s6 = ssub.s32 1, %s4
  %s7 = scalar_select 0, %s6, %s4
  $region1: #{tpu_custom_call.1} parent=0
    #allocation2 [shape = 'u8[8192]{0}', space=vmem, size = 0x2000, scoped, tag = 'output window, operand 0, single buffered']
    #allocation3 [shape = 's32[1]{0}', space=sflag, size = 0x4, scoped, tag = 'scoped memory for tpu_custom_call.1']
    %8 = vsyncpa [#allocation3], 0
    // Predicated region
    $region2: #{tpu_custom_call.1} parent=1 // pred_check
      _
    $region3: #{tpu_custom_call.1} parent=1 // pred_check_branch
      %10 = sbr.rel (0) target = $region5
    $region4: #{tpu_custom_call.1} parent=1 // pred_region
      _
    $region5: #{tpu_custom_call.1} parent=1 // pred_fallthru
      _
    // Predicated region
    $region6: #{tpu_custom_call.1} parent=1 // pred_check
      _
    $region7: #{tpu_custom_call.1} parent=1 // pred_check_branch
      %12 = sbr.rel (0) target = $region9
    $region8: #{tpu_custom_call.1} parent=1 // pred_region
      _
    $region9: #{tpu_custom_call.1} parent=1 // pred_fallthru
      _
    // Predicated region
    $region10: #{tpu_custom_call.1} parent=1 // pred_check
      _
    $region11: #{tpu_custom_call.1} parent=1 // pred_check_branch
      %14 = sbr.rel (0) target = $region13
    $region12: #{tpu_custom_call.1} parent=1 // pred_region
      _
    $region13: #{tpu_custom_call.1} parent=1 // pred_fallthru
      _
    %v15 = vld [vmem:[%s0] sm:$0xff]
    %v16 = vld [vmem:[%s0 + $0x8] sm:$0xff]
    %v17 = vld [vmem:[%s1] sm:$0xf]
    %v18 = vld [vmem:[%s2] sm:$0x1]
    %v20 = vlaneseq
    %v21 = vshrl.u32 %v20, 7
    %v22 = vsub.s32 0, %v21
    %v23 = vrot.slane %v18, %v22
    %vm25 = vcmask 31744
    %v27 = vsel %vm25, %v15, 0
    %v30 = vsel %vm25, %v16, 0
    %vm32 = vcmask 1043456
    %v34 = vsel %vm32, %v17, 0
    %36 = vmatprep.subr.mxu0 0.0
    %v37 = vand.u32 %v34, 4294901760
    %38 = vmatpush1.msra.mxu0 %v37
    %39 = vmatprep.subr.mxu0 0.0
    %40 = vmatpush1.msra.mxu0 0.0
    %41 = vmatprep.subr.mxu0 0.0
    %42 = vmatpush1.msra.mxu0 0.0
    %43 = vmatprep.subr.mxu0 0.0
    %44 = vmatpush1.msra.mxu0 0.0
    %45 = vmatprep.subr.mxu0 0.0
    %46 = vmatpush1.msra.mxu0 0.0
    %47 = vmatprep.subr.mxu0 0.0
    %48 = vmatpush1.msra.mxu0 0.0
    %49 = vmatprep.subr.mxu0 0.0
    %50 = vmatpush1.msra.mxu0 0.0
    %51 = vmatprep.subr.mxu0 0.0
    %52 = vmatpush1.msra.mxu0 0.0
    %53 = vmatprep.subr.mxu0 0.0
    %54 = vmatpush1.msra.mxu0 0.0
    %55 = vmatprep.subr.mxu0 0.0
    %56 = vmatpush1.msra.mxu0 0.0
    %57 = vmatprep.subr.mxu0 0.0
    %58 = vmatpush1.msra.mxu0 0.0
    %59 = vmatprep.subr.mxu0 0.0
    %60 = vmatpush1.msra.mxu0 0.0
    %61 = vmatprep.subr.mxu0 0.0
    %62 = vmatpush1.msra.mxu0 0.0
    %63 = vmatprep.subr.mxu0 0.0
    %64 = vmatpush1.msra.mxu0 0.0
    %65 = vmatprep.subr.mxu0 0.0
    %66 = vmatpush1.msra.mxu0 0.0
    %67 = vmatprep.subr.mxu0 0.0
    %68 = vmatpush1.msra.mxu0 0.0
    %69 = vmatprep.subr.mxu0 0.0
    %70 = vmatpush1.msra.mxu0 0.0
    %71 = vmatprep.subr.mxu0 0.0
    %72 = vmatpush1.msra.mxu0 0.0
    %73 = vmatprep.subr.mxu0 0.0
    %74 = vmatpush1.msra.mxu0 0.0
    %75 = vmatprep.subr.mxu0 0.0
    %76 = vmatpush1.msra.mxu0 0.0
    %77 = vmatprep.subr.mxu0 0.0
    %78 = vmatpush1.msra.mxu0 0.0
    %79 = vmatprep.subr.mxu0 0.0
    %80 = vmatpush1.msra.mxu0 0.0
    %81 = vmatprep.subr.mxu0 0.0
    %82 = vmatpush1.msra.mxu0 0.0
    %83 = vmatprep.subr.mxu0 0.0
    %84 = vmatpush1.msra.mxu0 0.0
    %85 = vmatprep.subr.mxu0 0.0
    %86 = vmatpush1.msra.mxu0 0.0
    %87 = vmatprep.subr.mxu0 0.0
    %88 = vmatpush1.msra.mxu0 0.0
    %89 = vmatprep.subr.mxu0 0.0
    %90 = vmatpush1.msra.mxu0 0.0
    %91 = vmatprep.subr.mxu0 0.0
    %92 = vmatpush1.msra.mxu0 0.0
    %93 = vmatprep.subr.mxu0 0.0
    %94 = vmatpush1.msra.mxu0 0.0
    %95 = vmatprep.subr.mxu0 0.0
    %96 = vmatpush1.msra.mxu0 0.0
    %97 = vmatprep.subr.mxu0 0.0
    %98 = vmatpush1.msra.mxu0 0.0
    %99 = vmatprep.subr.mxu0 0.0
    %100 = vmatpush1.msra.mxu0 0.0
    %101 = vmatprep.mubr.f32.mxu0 0.0
    %v102 = vand.u32 %v27, 4294901760
    %v103 = vsub.f32 %v27, %v102
    %v104 = vand.u32 %v103, 4294901760
    %v105 = vsub.f32 %v103, %v104
    %v106 = vand.u32 %v105, 4294901760
    %107 = vmatmul.mubr.f32.gmra.mrb[0].mxu0 %v106
    %v108 = vpop.f32.mrb[0].mxu0
    %v109 = vadd.f32 %v23, %v108
    %v110 = vpop.f32.mrb[0].mxu0
    %111 = vmatprep.mubr.f32.mxu0 0.0
    %v112 = vand.u32 %v30, 4294901760
    %v113 = vsub.f32 %v30, %v112
    %v114 = vand.u32 %v113, 4294901760
    %v115 = vsub.f32 %v113, %v114
    %v116 = vand.u32 %v115, 4294901760
    %117 = vmatmul.mubr.f32.gmra.mrb[0].mxu0 %v116
    %v118 = vpop.f32.mrb[0].mxu0
    %v119 = vadd.f32 %v23, %v118
    %v120 = vpop.f32.mrb[0].mxu0
    %121 = vdwg.mxu0
    %122 = vmatprep.subr.mxu0 0.0
    %v123 = vand.u32 %v34, 4294901760
    %v124 = vsub.f32 %v34, %v123
    %v125 = vand.u32 %v124, 4294901760
    %v126 = vsub.f32 %v124, %v125
    %v127 = vand.u32 %v126, 4294901760
    %128 = vmatpush1.msra.mxu0 %v127
    %129 = vmatprep.subr.mxu0 0.0
    %130 = vmatpush1.msra.mxu0 0.0
    %131 = vmatprep.subr.mxu0 0.0
    %132 = vmatpush1.msra.mxu0 0.0
    %133 = vmatprep.subr.mxu0 0.0
    %134 = vmatpush1.msra.mxu0 0.0
    %135 = vmatprep.subr.mxu0 0.0
    %136 = vmatpush1.msra.mxu0 0.0
    %137 = vmatprep.subr.mxu0 0.0
    %138 = vmatpush1.msra.mxu0 0.0
    %139 = vmatprep.subr.mxu0 0.0
    %140 = vmatpush1.msra.mxu0 0.0
    %141 = vmatprep.subr.mxu0 0.0
    %142 = vmatpush1.msra.mxu0 0.0
    %143 = vmatprep.subr.mxu0 0.0
    %144 = vmatpush1.msra.mxu0 0.0
    %145 = vmatprep.subr.mxu0 0.0
    %146 = vmatpush1.msra.mxu0 0.0
    %147 = vmatprep.subr.mxu0 0.0
    %148 = vmatpush1.msra.mxu0 0.0
    %149 = vmatprep.subr.mxu0 0.0
    %150 = vmatpush1.msra.mxu0 0.0
    %151 = vmatprep.subr.mxu0 0.0
    %152 = vmatpush1.msra.mxu0 0.0
    %153 = vmatprep.subr.mxu0 0.0
    %154 = vmatpush1.msra.mxu0 0.0
    %155 = vmatprep.subr.mxu0 0.0
    %156 = vmatpush1.msra.mxu0 0.0
    %157 = vmatprep.subr.mxu0 0.0
    %158 = vmatpush1.msra.mxu0 0.0
    %159 = vmatprep.subr.mxu0 0.0
    %160 = vmatpush1.msra.mxu0 0.0
    %161 = vmatprep.subr.mxu0 0.0
    %162 = vmatpush1.msra.mxu0 0.0
    %163 = vmatprep.subr.mxu0 0.0
    %164 = vmatpush1.msra.mxu0 0.0
    %165 = vmatprep.subr.mxu0 0.0
    %166 = vmatpush1.msra.mxu0 0.0
    %167 = vmatprep.subr.mxu0 0.0
    %168 = vmatpush1.msra.mxu0 0.0
    %169 = vmatprep.subr.mxu0 0.0
    %170 = vmatpush1.msra.mxu0 0.0
    %171 = vmatprep.subr.mxu0 0.0
    %172 = vmatpush1.msra.mxu0 0.0
    %173 = vmatprep.subr.mxu0 0.0
    %174 = vmatpush1.msra.mxu0 0.0
    %175 = vmatprep.subr.mxu0 0.0
    %176 = vmatpush1.msra.mxu0 0.0
    %177 = vmatprep.subr.mxu0 0.0
    %178 = vmatpush1.msra.mxu0 0.0
    %179 = vmatprep.subr.mxu0 0.0
    %180 = vmatpush1.msra.mxu0 0.0
    %181 = vmatprep.subr.mxu0 0.0
    %182 = vmatpush1.msra.mxu0 0.0
    %183 = vmatprep.subr.mxu0 0.0
    %184 = vmatpush1.msra.mxu0 0.0
    %185 = vmatprep.subr.mxu0 0.0
    %186 = vmatpush1.msra.mxu0 0.0
    %187 = vmatprep.subr.mxu0 0.0
    %188 = vmatpush1.msra.mxu0 0.0
    %189 = vmatprep.subr.mxu0 0.0
    %190 = vmatpush1.msra.mxu0 0.0
    %191 = vmatprep.mubr.f32.mxu0 0.0
    %v192 = vand.u32 %v27, 4294901760
    %193 = vmatmul.mubr.f32.gmra.mrb[0].mxu0 %v192
    %v194 = vpop.f32.mrb[0].mxu0
    %v195 = vadd.f32 %v109, %v194
    %v196 = vpop.f32.mrb[0].mxu0
    %197 = vmatprep.mubr.f32.mxu0 0.0
    %v198 = vand.u32 %v30, 4294901760
    %199 = vmatmul.mubr.f32.gmra.mrb[0].mxu0 %v198
    %v200 = vpop.f32.mrb[0].mxu0
    %v201 = vadd.f32 %v119, %v200
    %v202 = vpop.f32.mrb[0].mxu0
    %203 = vdwg.mxu0
    %204 = vmatprep.subr.mxu0 0.0
    %v205 = vand.u32 %v34, 4294901760
    %v206 = vsub.f32 %v34, %v205
    %207 = vmatpush1.msra.mxu0 %v206
    %208 = vmatprep.subr.mxu0 0.0
    %209 = vmatpush1.msra.mxu0 0.0
    %210 = vmatprep.subr.mxu0 0.0
    %211 = vmatpush1.msra.mxu0 0.0
    %212 = vmatprep.subr.mxu0 0.0
    %213 = vmatpush1.msra.mxu0 0.0
    %214 = vmatprep.subr.mxu0 0.0
    %215 = vmatpush1.msra.mxu0 0.0
    %216 = vmatprep.subr.mxu0 0.0
    %217 = vmatpush1.msra.mxu0 0.0
    %218 = vmatprep.subr.mxu0 0.0
    %219 = vmatpush1.msra.mxu0 0.0
    %220 = vmatprep.subr.mxu0 0.0
    %221 = vmatpush1.msra.mxu0 0.0
    %222 = vmatprep.subr.mxu0 0.0
    %223 = vmatpush1.msra.mxu0 0.0
    %224 = vmatprep.subr.mxu0 0.0
    %225 = vmatpush1.msra.mxu0 0.0
    %226 = vmatprep.subr.mxu0 0.0
    %227 = vmatpush1.msra.mxu0 0.0
    %228 = vmatprep.subr.mxu0 0.0
    %229 = vmatpush1.msra.mxu0 0.0
    %230 = vmatprep.subr.mxu0 0.0
    %231 = vmatpush1.msra.mxu0 0.0
    %232 = vmatprep.subr.mxu0 0.0
    %233 = vmatpush1.msra.mxu0 0.0
    %234 = vmatprep.subr.mxu0 0.0
    %235 = vmatpush1.msra.mxu0 0.0
    %236 = vmatprep.subr.mxu0 0.0
    %237 = vmatpush1.msra.mxu0 0.0
    %238 = vmatprep.subr.mxu0 0.0
    %239 = vmatpush1.msra.mxu0 0.0
    %240 = vmatprep.subr.mxu0 0.0
    %241 = vmatpush1.msra.mxu0 0.0
    %242 = vmatprep.subr.mxu0 0.0
    %243 = vmatpush1.msra.mxu0 0.0
    %244 = vmatprep.subr.mxu0 0.0
    %245 = vmatpush1.msra.mxu0 0.0
    %246 = vmatprep.subr.mxu0 0.0
    %247 = vmatpush1.msra.mxu0 0.0
    %248 = vmatprep.subr.mxu0 0.0
    %249 = vmatpush1.msra.mxu0 0.0
    %250 = vmatprep.subr.mxu0 0.0
    %251 = vmatpush1.msra.mxu0 0.0
    %252 = vmatprep.subr.mxu0 0.0
    %253 = vmatpush1.msra.mxu0 0.0
    %254 = vmatprep.subr.mxu0 0.0
    %255 = vmatpush1.msra.mxu0 0.0
    %256 = vmatprep.subr.mxu0 0.0
    %257 = vmatpush1.msra.mxu0 0.0
    %258 = vmatprep.subr.mxu0 0.0
    %259 = vmatpush1.msra.mxu0 0.0
    %260 = vmatprep.subr.mxu0 0.0
    %261 = vmatpush1.msra.mxu0 0.0
    %262 = vmatprep.subr.mxu0 0.0
    %263 = vmatpush1.msra.mxu0 0.0
    %264 = vmatprep.subr.mxu0 0.0
    %265 = vmatpush1.msra.mxu0 0.0
    %266 = vmatprep.subr.mxu0 0.0
    %267 = vmatpush1.msra.mxu0 0.0
    %268 = vmatprep.subr.mxu0 0.0
    %269 = vmatpush1.msra.mxu0 0.0
    %270 = vmatprep.mubr.f32.mxu0 0.0
    %v271 = vand.u32 %v27, 4294901760
    %v272 = vsub.f32 %v27, %v271
    %273 = vmatmul.mubr.f32.gmra.mrb[0].mxu0 %v272
    %v274 = vpop.f32.mrb[0].mxu0
    %v275 = vadd.f32 %v195, %v274
    %v276 = vpop.f32.mrb[0].mxu0
    %277 = vmatprep.mubr.f32.mxu0 0.0
    %v278 = vand.u32 %v30, 4294901760
    %v279 = vsub.f32 %v30, %v278
    %280 = vmatmul.mubr.f32.gmra.mrb[0].mxu0 %v279
    %v281 = vpop.f32.mrb[0].mxu0
    %v282 = vadd.f32 %v201, %v281
    %v283 = vpop.f32.mrb[0].mxu0
    %284 = vdwg.mxu0
    %285 = vmatprep.subr.mxu0 0.0
    %v286 = vand.u32 %v34, 4294901760
    %287 = vmatpush1.msra.mxu0 %v286
    %288 = vmatprep.subr.mxu0 0.0
    %289 = vmatpush1.msra.mxu0 0.0
    %290 = vmatprep.subr.mxu0 0.0
    %291 = vmatpush1.msra.mxu0 0.0
    %292 = vmatprep.subr.mxu0 0.0
    %293 = vmatpush1.msra.mxu0 0.0
    %294 = vmatprep.subr.mxu0 0.0
    %295 = vmatpush1.msra.mxu0 0.0
    %296 = vmatprep.subr.mxu0 0.0
    %297 = vmatpush1.msra.mxu0 0.0
    %298 = vmatprep.subr.mxu0 0.0
    %299 = vmatpush1.msra.mxu0 0.0
    %300 = vmatprep.subr.mxu0 0.0
    %301 = vmatpush1.msra.mxu0 0.0
    %302 = vmatprep.subr.mxu0 0.0
    %303 = vmatpush1.msra.mxu0 0.0
    %304 = vmatprep.subr.mxu0 0.0
    %305 = vmatpush1.msra.mxu0 0.0
    %306 = vmatprep.subr.mxu0 0.0
    %307 = vmatpush1.msra.mxu0 0.0
    %308 = vmatprep.subr.mxu0 0.0
    %309 = vmatpush1.msra.mxu0 0.0
    %310 = vmatprep.subr.mxu0 0.0
    %311 = vmatpush1.msra.mxu0 0.0
    %312 = vmatprep.subr.mxu0 0.0
    %313 = vmatpush1.msra.mxu0 0.0
    %314 = vmatprep.subr.mxu0 0.0
    %315 = vmatpush1.msra.mxu0 0.0
    %316 = vmatprep.subr.mxu0 0.0
    %317 = vmatpush1.msra.mxu0 0.0
    %318 = vmatprep.subr.mxu0 0.0
    %319 = vmatpush1.msra.mxu0 0.0
    %320 = vmatprep.subr.mxu0 0.0
    %321 = vmatpush1.msra.mxu0 0.0
    %322 = vmatprep.subr.mxu0 0.0
    %323 = vmatpush1.msra.mxu0 0.0
    %324 = vmatprep.subr.mxu0 0.0
    %325 = vmatpush1.msra.mxu0 0.0
    %326 = vmatprep.subr.mxu0 0.0
    %327 = vmatpush1.msra.mxu0 0.0
    %328 = vmatprep.subr.mxu0 0.0
    %329 = vmatpush1.msra.mxu0 0.0
    %330 = vmatprep.subr.mxu0 0.0
    %331 = vmatpush1.msra.mxu0 0.0
    %332 = vmatprep.subr.mxu0 0.0
    %333 = vmatpush1.msra.mxu0 0.0
    %334 = vmatprep.subr.mxu0 0.0
    %335 = vmatpush1.msra.mxu0 0.0
    %336 = vmatprep.subr.mxu0 0.0
    %337 = vmatpush1.msra.mxu0 0.0
    %338 = vmatprep.subr.mxu0 0.0
    %339 = vmatpush1.msra.mxu0 0.0
    %340 = vmatprep.subr.mxu0 0.0
    %341 = vmatpush1.msra.mxu0 0.0
    %342 = vmatprep.subr.mxu0 0.0
    %343 = vmatpush1.msra.mxu0 0.0
    %344 = vmatprep.subr.mxu0 0.0
    %345 = vmatpush1.msra.mxu0 0.0
    %346 = vmatprep.subr.mxu0 0.0
    %347 = vmatpush1.msra.mxu0 0.0
    %348 = vmatprep.subr.mxu0 0.0
    %349 = vmatpush1.msra.mxu0 0.0
    %350 = vmatprep.mubr.f32.mxu0 0.0
    %v351 = vand.u32 %v27, 4294901760
    %v352 = vsub.f32 %v27, %v351
    %v353 = vand.u32 %v352, 4294901760
    %354 = vmatmul.mubr.f32.gmra.mrb[0].mxu0 %v353
    %v355 = vpop.f32.mrb[0].mxu0
    %v356 = vadd.f32 %v275, %v355
    %v357 = vpop.f32.mrb[0].mxu0
    %358 = vmatprep.mubr.f32.mxu0 0.0
    %v359 = vand.u32 %v30, 4294901760
    %v360 = vsub.f32 %v30, %v359
    %v361 = vand.u32 %v360, 4294901760
    %362 = vmatmul.mubr.f32.gmra.mrb[0].mxu0 %v361
    %v363 = vpop.f32.mrb[0].mxu0
    %v364 = vadd.f32 %v282, %v363
    %v365 = vpop.f32.mrb[0].mxu0
    %366 = vdwg.mxu0
    %367 = vmatprep.subr.mxu0 0.0
    %v368 = vand.u32 %v34, 4294901760
    %v369 = vsub.f32 %v34, %v368
    %v370 = vand.u32 %v369, 4294901760
    %371 = vmatpush1.msra.mxu0 %v370
    %372 = vmatprep.subr.mxu0 0.0
    %373 = vmatpush1.msra.mxu0 0.0
    %374 = vmatprep.subr.mxu0 0.0
    %375 = vmatpush1.msra.mxu0 0.0
    %376 = vmatprep.subr.mxu0 0.0
    %377 = vmatpush1.msra.mxu0 0.0
    %378 = vmatprep.subr.mxu0 0.0
    %379 = vmatpush1.msra.mxu0 0.0
    %380 = vmatprep.subr.mxu0 0.0
    %381 = vmatpush1.msra.mxu0 0.0
    %382 = vmatprep.subr.mxu0 0.0
    %383 = vmatpush1.msra.mxu0 0.0
    %384 = vmatprep.subr.mxu0 0.0
    %385 = vmatpush1.msra.mxu0 0.0
    %386 = vmatprep.subr.mxu0 0.0
    %387 = vmatpush1.msra.mxu0 0.0
    %388 = vmatprep.subr.mxu0 0.0
    %389 = vmatpush1.msra.mxu0 0.0
    %390 = vmatprep.subr.mxu0 0.0
    %391 = vmatpush1.msra.mxu0 0.0
    %392 = vmatprep.subr.mxu0 0.0
    %393 = vmatpush1.msra.mxu0 0.0
    %394 = vmatprep.subr.mxu0 0.0
    %395 = vmatpush1.msra.mxu0 0.0
    %396 = vmatprep.subr.mxu0 0.0
    %397 = vmatpush1.msra.mxu0 0.0
    %398 = vmatprep.subr.mxu0 0.0
    %399 = vmatpush1.msra.mxu0 0.0
    %400 = vmatprep.subr.mxu0 0.0
    %401 = vmatpush1.msra.mxu0 0.0
    %402 = vmatprep.subr.mxu0 0.0
    %403 = vmatpush1.msra.mxu0 0.0
    %404 = vmatprep.subr.mxu0 0.0
    %405 = vmatpush1.msra.mxu0 0.0
    %406 = vmatprep.subr.mxu0 0.0
    %407 = vmatpush1.msra.mxu0 0.0
    %408 = vmatprep.subr.mxu0 0.0
    %409 = vmatpush1.msra.mxu0 0.0
    %410 = vmatprep.subr.mxu0 0.0
    %411 = vmatpush1.msra.mxu0 0.0
    %412 = vmatprep.subr.mxu0 0.0
    %413 = vmatpush1.msra.mxu0 0.0
    %414 = vmatprep.subr.mxu0 0.0
    %415 = vmatpush1.msra.mxu0 0.0
    %416 = vmatprep.subr.mxu0 0.0
    %417 = vmatpush1.msra.mxu0 0.0
    %418 = vmatprep.subr.mxu0 0.0
    %419 = vmatpush1.msra.mxu0 0.0
    %420 = vmatprep.subr.mxu0 0.0
    %421 = vmatpush1.msra.mxu0 0.0
    %422 = vmatprep.subr.mxu0 0.0
    %423 = vmatpush1.msra.mxu0 0.0
    %424 = vmatprep.subr.mxu0 0.0
    %425 = vmatpush1.msra.mxu0 0.0
    %426 = vmatprep.subr.mxu0 0.0
    %427 = vmatpush1.msra.mxu0 0.0
    %428 = vmatprep.subr.mxu0 0.0
    %429 = vmatpush1.msra.mxu0 0.0
    %430 = vmatprep.subr.mxu0 0.0
    %431 = vmatpush1.msra.mxu0 0.0
    %432 = vmatprep.subr.mxu0 0.0
    %433 = vmatpush1.msra.mxu0 0.0
    %434 = vmatprep.mubr.f32.mxu0 0.0
    %v435 = vand.u32 %v27, 4294901760
    %436 = vmatmul.mubr.f32.gmra.mrb[0].mxu0 %v435
    %v437 = vpop.f32.mrb[0].mxu0
    %v438 = vadd.f32 %v356, %v437
    %v439 = vpop.f32.mrb[0].mxu0
    %440 = vmatprep.mubr.f32.mxu0 0.0
    %v441 = vand.u32 %v30, 4294901760
    %442 = vmatmul.mubr.f32.gmra.mrb[0].mxu0 %v441
    %v443 = vpop.f32.mrb[0].mxu0
    %v444 = vadd.f32 %v364, %v443
    %v445 = vpop.f32.mrb[0].mxu0
    %446 = vdwg.mxu0
    %447 = vmatprep.subr.mxu0 0.0
    %v448 = vand.u32 %v34, 4294901760
    %449 = vmatpush1.msra.mxu0 %v448
    %450 = vmatprep.subr.mxu0 0.0
    %451 = vmatpush1.msra.mxu0 0.0
    %452 = vmatprep.subr.mxu0 0.0
    %453 = vmatpush1.msra.mxu0 0.0
    %454 = vmatprep.subr.mxu0 0.0
    %455 = vmatpush1.msra.mxu0 0.0
    %456 = vmatprep.subr.mxu0 0.0
    %457 = vmatpush1.msra.mxu0 0.0
    %458 = vmatprep.subr.mxu0 0.0
    %459 = vmatpush1.msra.mxu0 0.0
    %460 = vmatprep.subr.mxu0 0.0
    %461 = vmatpush1.msra.mxu0 0.0
    %462 = vmatprep.subr.mxu0 0.0
    %463 = vmatpush1.msra.mxu0 0.0
    %464 = vmatprep.subr.mxu0 0.0
    %465 = vmatpush1.msra.mxu0 0.0
    %466 = vmatprep.subr.mxu0 0.0
    %467 = vmatpush1.msra.mxu0 0.0
    %468 = vmatprep.subr.mxu0 0.0
    %469 = vmatpush1.msra.mxu0 0.0
    %470 = vmatprep.subr.mxu0 0.0
    %471 = vmatpush1.msra.mxu0 0.0
    %472 = vmatprep.subr.mxu0 0.0
    %473 = vmatpush1.msra.mxu0 0.0
    %474 = vmatprep.subr.mxu0 0.0
    %475 = vmatpush1.msra.mxu0 0.0
    %476 = vmatprep.subr.mxu0 0.0
    %477 = vmatpush1.msra.mxu0 0.0
    %478 = vmatprep.subr.mxu0 0.0
    %479 = vmatpush1.msra.mxu0 0.0
    %480 = vmatprep.subr.mxu0 0.0
    %481 = vmatpush1.msra.mxu0 0.0
    %482 = vmatprep.subr.mxu0 0.0
    %483 = vmatpush1.msra.mxu0 0.0
    %484 = vmatprep.subr.mxu0 0.0
    %485 = vmatpush1.msra.mxu0 0.0
    %486 = vmatprep.subr.mxu0 0.0
    %487 = vmatpush1.msra.mxu0 0.0
    %488 = vmatprep.subr.mxu0 0.0
    %489 = vmatpush1.msra.mxu0 0.0
    %490 = vmatprep.subr.mxu0 0.0
    %491 = vmatpush1.msra.mxu0 0.0
    %492 = vmatprep.subr.mxu0 0.0
    %493 = vmatpush1.msra.mxu0 0.0
    %494 = vmatprep.subr.mxu0 0.0
    %495 = vmatpush1.msra.mxu0 0.0
    %496 = vmatprep.subr.mxu0 0.0
    %497 = vmatpush1.msra.mxu0 0.0
    %498 = vmatprep.subr.mxu0 0.0
    %499 = vmatpush1.msra.mxu0 0.0
    %500 = vmatprep.subr.mxu0 0.0
    %501 = vmatpush1.msra.mxu0 0.0
    %502 = vmatprep.subr.mxu0 0.0
    %503 = vmatpush1.msra.mxu0 0.0
    %504 = vmatprep.subr.mxu0 0.0
    %505 = vmatpush1.msra.mxu0 0.0
    %506 = vmatprep.subr.mxu0 0.0
    %507 = vmatpush1.msra.mxu0 0.0
    %508 = vmatprep.subr.mxu0 0.0
    %509 = vmatpush1.msra.mxu0 0.0
    %510 = vmatprep.subr.mxu0 0.0
    %511 = vmatpush1.msra.mxu0 0.0
    %512 = vmatprep.mubr.f32.mxu0 0.0
    %v513 = vand.u32 %v27, 4294901760
    %514 = vmatmul.mubr.f32.gmra.mrb[0].mxu0 %v513
    %v515 = vpop.f32.mrb[0].mxu0
    %v516 = vadd.f32 %v438, %v515
    %v517 = vpop.f32.mrb[0].mxu0
    %518 = vmatprep.mubr.f32.mxu0 0.0
    %v519 = vand.u32 %v30, 4294901760
    %520 = vmatmul.mubr.f32.gmra.mrb[0].mxu0 %v519
    %v521 = vpop.f32.mrb[0].mxu0
    %v522 = vadd.f32 %v444, %v521
    %v523 = vpop.f32.mrb[0].mxu0
    %524 = vdwg.mxu0
    %525 = vst [vmem:[#allocation2] sm:$0xff] %v516
    %526 = vst [vmem:[#allocation2 + $0x8] sm:$0xff] %v522
    // Predicated region
    $region14: #{tpu_custom_call.1} parent=1 // pred_check
      _
    $region15: #{tpu_custom_call.1} parent=1 // pred_check_branch
      %528 = sbr.rel (0) target = $region17
    $region16: #{tpu_custom_call.1} parent=1 // pred_region
      %s530 = ssub.s32 256, 256
      %531 = vsyncadd [#allocation3], %s530
      %s532 = sshll.u32 [#allocation2], 4
      %s533 = int_to_ptr.vmem [resolvable:$true] %s532
      %538 = dma.vmem_to_hbm [thread:$0]  %s533, 256, %s3, [#allocation3], 128, 128, 8
    $region17: #{tpu_custom_call.1} parent=1 // pred_fallthru
      _
    // Predicated region
    $region18: #{tpu_custom_call.1} parent=1 // pred_check
      _
    $region19: #{tpu_custom_call.1} parent=1 // pred_check_branch
      %540 = sbr.rel (0) target = $region21
    $region20: #{tpu_custom_call.1} parent=1 // pred_region
      %541 = dma.done [#allocation3], 256
    $region21: #{tpu_custom_call.1} parent=1 // pred_fallthru
      _
    %542 = vsyncpa [#allocation3], 1

</llo_original>
